<compile_context>
chip_gen: v5e
topology: v5e:2x2
jax: 0.10.0
libtpu: 0.0.40
codegen_flags: <defaults>
</compile_context>

<pallas_src>
import functools

import jax
import jax.numpy as jnp
from jax.experimental import pallas as pl
from jax.experimental.pallas import tpu as pltpu


def _round_up(x, m):
    return ((x + m - 1) // m) * m


def _contrastive_loss_kernel(x0_ref, x1_ref, lab_ref, out_ref, *,
                             margin, scale, batch, block_b):
    # x0_ref/x1_ref: (TB, D); lab_ref: (TB, 1); out_ref: (1, 8, 128) partials.
    diff = x0_ref[...].astype(jnp.float32) - x1_ref[...].astype(jnp.float32)
    dists = jnp.sum(diff * diff, axis=1, keepdims=True)        # (TB, 1)  XLU reduce
    lab = lab_ref[...].astype(jnp.float32)                     # (TB, 1)
    hinge = jnp.maximum(margin - dists, 0.0)                   # relu(margin - d)
    losses = lab * dists + (1.0 - lab) * hinge * scale
    losses = jnp.maximum(losses, 0.0)                          # clamp(min=0)

    # Mask rows past the true batch size (ragged / padded last tile).
    row = (pl.program_id(0) * block_b
           + jax.lax.broadcasted_iota(jnp.int32, losses.shape, 0))
    losses = jnp.where(row < batch, losses, 0.0)

    partial = jnp.sum(losses)                                  # scalar per tile
    # Lane-dense, unmasked store of the per-tile partial sum.
    out_ref[...] = jnp.full(out_ref.shape, partial, dtype=out_ref.dtype)


def contrastive_loss(x0, x1, labels, margin=1.0, train_flag=True, block_b=512):
    """Pallas implementation of ContrastiveLoss.forward((x0, x1), labels)."""
    x0 = jnp.asarray(x0)          # keep native dtype (bf16 stays bf16)
    x1 = jnp.asarray(x1)
    b, d = x0.shape
    # labels.reshape(-1) then lift to (B, 1) so the kernel sees a 2-D tile.
    lab2d = jnp.asarray(labels).reshape(-1).astype(jnp.float32).reshape(b, 1)

    scale = 5.0 if train_flag else 1.0
    # Batch tile: big tiles amortize per-step overhead; cap keeps
    # 2 inputs x 2 buffers x TB x D well inside the per-generation VMEM budget.
    tb = min(int(block_b), _round_up(b, 8))
    num_tiles = (b + tb - 1) // tb

    kernel = functools.partial(
        _contrastive_loss_kernel,
        margin=float(margin), scale=float(scale), batch=b, block_b=tb,
    )

    grid_spec = pltpu.PrefetchScalarGridSpec(
        num_scalar_prefetch=0,
        grid=(num_tiles,),
        in_specs=[
            pl.BlockSpec((tb, d), lambda i: (i, 0)),   # x0 tile
            pl.BlockSpec((tb, d), lambda i: (i, 0)),   # x1 tile
            pl.BlockSpec((tb, 1), lambda i: (i, 0)),   # labels tile
        ],
        out_specs=pl.BlockSpec((1, 8, 128), lambda i: (i, 0, 0)),
    )

    itemsize = jnp.dtype(x0.dtype).itemsize
    cost = pl.CostEstimate(
        flops=3 * b * d,
        transcendentals=0,
        bytes_accessed=2 * b * d * itemsize + b * 4 + num_tiles * 8 * 128 * 4,
    )

    partials = pl.pallas_call(
        kernel,
        out_shape=jax.ShapeDtypeStruct((num_tiles, 8, 128), jnp.float32),
        grid_spec=grid_spec,
        compiler_params=pltpu.CompilerParams(
            dimension_semantics=("parallel",),
        ),
        cost_estimate=cost,
    )(x0, x1, lab2d)

    # Tiny final reduction over per-tile partial sums + mean over B.
    return jnp.sum(partials[:, 0, 0]) / b


def _reference(x0, x1, labels, margin=1.0, train_flag=True):
    d = jnp.sum((x0.astype(jnp.float32) - x1.astype(jnp.float32)) ** 2, axis=1)
    lab = labels.reshape(-1).astype(jnp.float32)
    scale = 5.0 if train_flag else 1.0
    losses = lab * d + (1.0 - lab) * jnp.maximum(margin - d, 0.0) * scale
    losses = jnp.maximum(losses, 0.0)
    return jnp.mean(losses)


if __name__ == "__main__":
    key = jax.random.PRNGKey(0)
    k0, k1, k2 = jax.random.split(key, 3)

    # Small synthetic shapes: 8 pairs of 32-dim embeddings.
    B, D = 8, 32
    x0 = jax.random.normal(k0, (B, D), dtype=jnp.float32) * 0.5
    x1 = jax.random.normal(k1, (B, D), dtype=jnp.float32) * 0.5
    labels = jax.random.bernoulli(k2, p=0.5, shape=(B,)).astype(jnp.float32)

    loss_train = contrastive_loss(x0, x1, labels, margin=1.0, train_flag=True)
    loss_eval = contrastive_loss(x0, x1, labels, margin=1.0, train_flag=False)
    jax.block_until_ready(loss_train)
    jax.block_until_ready(loss_eval)

    ref_train = _reference(x0, x1, labels, margin=1.0, train_flag=True)
    ref_eval = _reference(x0, x1, labels, margin=1.0, train_flag=False)
    assert jnp.allclose(loss_train, ref_train, rtol=1e-5, atol=1e-5), (
        loss_train, ref_train)
    assert jnp.allclose(loss_eval, ref_eval, rtol=1e-5, atol=1e-5), (
        loss_eval, ref_eval)

    # Ragged batch (B not a multiple of 8) exercises the in-kernel row mask.
    B2 = 10
    x0b = jax.random.normal(k0, (B2, D), dtype=jnp.float32)
    x1b = jax.random.normal(k1, (B2, D), dtype=jnp.float32)
    labb = jax.random.bernoulli(k2, p=0.5, shape=(B2,)).astype(jnp.float32)
    out_ragged = contrastive_loss(x0b, x1b, labb, margin=1.0, train_flag=True)
    jax.block_until_ready(out_ragged)
    assert jnp.allclose(out_ragged, _reference(x0b, x1b, labb, 1.0, True),
                        rtol=1e-5, atol=1e-5)

    # Multi-tile grid (forces num_tiles > 1) exercises the parallel grid axis
    # and the partial-sum reduction path.
    B3 = 24
    x0c = jax.random.normal(k0, (B3, D), dtype=jnp.float32)
    x1c = jax.random.normal(k1, (B3, D), dtype=jnp.float32)
    labc = jax.random.bernoulli(k2, p=0.5, shape=(B3,)).astype(jnp.float32)
    out_multi = contrastive_loss(x0c, x1c, labc, margin=1.0, train_flag=False,
                                 block_b=8)
    jax.block_until_ready(out_multi)
    assert jnp.allclose(out_multi, _reference(x0c, x1c, labc, 1.0, False),
                        rtol=1e-5, atol=1e-5)

    print("KERNEL_OK")
</pallas_src>

<mosaic_0001>
module attributes {stable_mosaic.version = 11 : i64} {
  func.func @_contrastive_loss_kernel(%arg0: i32, %arg1: memref<8x32xf32, #tpu.memory_space<vmem>>, %arg2: memref<8x32xf32, #tpu.memory_space<vmem>>, %arg3: memref<8x1xf32, #tpu.memory_space<vmem>>, %arg4: memref<1x8x128xf32, #tpu.memory_space<vmem>>) attributes {dimension_semantics = [#tpu.dimension_semantics<parallel>], iteration_bounds = array<i64: 1>, scalar_prefetch = 0 : i64, scratch_operands = 0 : i64, tpu.core_type = #tpu.core_type<tc>, window_params = [{transform_indices = @transform_0, window_bounds = array<i64: 8, 32>}, {transform_indices = @transform_1, window_bounds = array<i64: 8, 32>}, {transform_indices = @transform_2, window_bounds = array<i64: 8, 1>}, {transform_indices = @transform_3, window_bounds = array<i64: 1, 8, 128>}]} {
    %c0 = arith.constant 0 : index
    %c0_0 = arith.constant 0 : index
    %0 = vector.load %arg1[%c0, %c0_0] : memref<8x32xf32, #tpu.memory_space<vmem>>, vector<8x32xf32>
    %c0_1 = arith.constant 0 : index
    %c0_2 = arith.constant 0 : index
    %1 = vector.load %arg2[%c0_1, %c0_2] : memref<8x32xf32, #tpu.memory_space<vmem>>, vector<8x32xf32>
    %2 = arith.subf %0, %1 : vector<8x32xf32>
    %3 = arith.mulf %2, %2 : vector<8x32xf32>
    %cst = arith.constant dense<0.000000e+00> : vector<8xf32>
    %4 = vector.multi_reduction <add>, %3, %cst [1] : vector<8x32xf32> to vector<8xf32>
    %5 = vector.shape_cast %4 : vector<8xf32> to vector<8x1xf32>
    %c0_3 = arith.constant 0 : index
    %c0_4 = arith.constant 0 : index
    %6 = vector.load %arg3[%c0_3, %c0_4] : memref<8x1xf32, #tpu.memory_space<vmem>>, vector<8x1xf32>
    %cst_5 = arith.constant 1.000000e+00 : f32
    %7 = vector.broadcast %cst_5 : f32 to vector<8x1xf32>
    %8 = arith.subf %7, %5 : vector<8x1xf32>
    %cst_6 = arith.constant 0.000000e+00 : f32
    %9 = vector.broadcast %cst_6 : f32 to vector<8x1xf32>
    %10 = arith.maximumf %8, %9 : vector<8x1xf32>
    %11 = arith.mulf %6, %5 : vector<8x1xf32>
    %cst_7 = arith.constant 1.000000e+00 : f32
    %12 = vector.broadcast %cst_7 : f32 to vector<8x1xf32>
    %13 = arith.subf %12, %6 : vector<8x1xf32>
    %14 = arith.mulf %13, %10 : vector<8x1xf32>
    %cst_8 = arith.constant 5.000000e+00 : f32
    %15 = vector.broadcast %cst_8 : f32 to vector<8x1xf32>
    %16 = arith.mulf %14, %15 : vector<8x1xf32>
    %17 = arith.addf %11, %16 : vector<8x1xf32>
    %cst_9 = arith.constant 0.000000e+00 : f32
    %18 = vector.broadcast %cst_9 : f32 to vector<8x1xf32>
    %19 = arith.maximumf %17, %18 : vector<8x1xf32>
    %c8_i32 = arith.constant 8 : i32
    %20 = arith.muli %arg0, %c8_i32 : i32
    %21 = tpu.iota {dimensions = array<i32: 0>} : vector<8x1xi32>
    %22 = vector.broadcast %20 : i32 to vector<8x1xi32>
    %23 = arith.addi %22, %21 : vector<8x1xi32>
    %c8_i32_10 = arith.constant 8 : i32
    %24 = vector.broadcast %c8_i32_10 : i32 to vector<8x1xi32>
    %25 = arith.cmpi slt, %23, %24 : vector<8x1xi32>
    %cst_11 = arith.constant 0.000000e+00 : f32
    %26 = vector.broadcast %cst_11 : f32 to vector<8x1xf32>
    %27 = arith.select %25, %19, %26 : vector<8x1xi1>, vector<8x1xf32>
    %28 = vector.shape_cast %27 : vector<8x1xf32> to vector<1x8x1xf32>
    %cst_12 = arith.constant dense<0.000000e+00> : vector<1xf32>
    %29 = vector.multi_reduction <add>, %28, %cst_12 [1, 2] : vector<1x8x1xf32> to vector<1xf32>
    %30 = vector.shape_cast %29 : vector<1xf32> to vector<1x1x1xf32>
    %31 = vector.extract %30[0, 0, 0] : f32 from vector<1x1x1xf32>
    %32 = vector.broadcast %31 : f32 to vector<1x8x128xf32>
    %c0_13 = arith.constant 0 : index
    %c0_14 = arith.constant 0 : index
    %c0_15 = arith.constant 0 : index
    %33 = vector.load %arg4[%c0_13, %c0_14, %c0_15] : memref<1x8x128xf32, #tpu.memory_space<vmem>>, vector<1x8x128xf32>
    tpu.vector_store %arg4[%c0_13, %c0_14, %c0_15], %32 {strides = array<i32>} : memref<1x8x128xf32, #tpu.memory_space<vmem>>, vector<1x8x128xf32>,
    return
  }
  func.func @transform_0(%arg0: i32) -> (i32, i32) {
    %c0_i32 = arith.constant 0 : i32
    %c0_i32_0 = arith.constant 0 : i32
    return %arg0, %c0_i32 : i32, i32
  }
  func.func @transform_1(%arg0: i32) -> (i32, i32) {
    %c0_i32 = arith.constant 0 : i32
    %c0_i32_0 = arith.constant 0 : i32
    return %arg0, %c0_i32 : i32, i32
  }
  func.func @transform_2(%arg0: i32) -> (i32, i32) {
    %c0_i32 = arith.constant 0 : i32
    %c0_i32_0 = arith.constant 0 : i32
    return %arg0, %c0_i32 : i32, i32
  }
  func.func @transform_3(%arg0: i32) -> (i32, i32, i32) {
    %c0_i32 = arith.constant 0 : i32
    %c0_i32_0 = arith.constant 0 : i32
    %c0_i32_1 = arith.constant 0 : i32
    return %arg0, %c0_i32, %c0_i32_0 : i32, i32, i32
  }
}

</mosaic_0001>

<llo_original>
// kernel: tpu_custom_call.1
$region0: #{tpu_custom_call.1}
  #allocation0 [shape = 'u32[]', space=smem, size = 0x4, offset = 0x4, fixed_abs, tag = 'smem constant byte address 0x4 - core index']
  #allocation1 [shape = 'u32[72,128]{1,0:T(1,128)}', space=vmem, size = 0x9000, scoped, tag = 'internal scratch']
  %s0 = inlined_call_operand.vmem [shape: f32[8,32], index: 0, kind: input, shape index: {}]
  %s1 = inlined_call_operand.hbm [shape: f32[8,32], index: 1, kind: input, shape index: {}]
  %s2 = inlined_call_operand.vmem [shape: f32[8,1], index: 2, kind: input, shape index: {}]
  %s3 = inlined_call_operand.hbm [shape: f32[1,8,128], index: 3, kind: output, shape index: {}]
  %s4 = sld [smem:[#allocation0]]
  $region26: #{tpu_custom_call.1} parent=0
    _
  %s6 = ssub.s32 1, %s4
  %s7 = scalar_select 0, %s6, %s4
  $region1: #{tpu_custom_call.1} parent=0
    #allocation2 [shape = 'u8[4096]{0}', space=vmem, size = 0x1000, scoped, tag = 'input window, operand 1, single buffered']
    #allocation3 [shape = 's32[1]{0}', space=sflag, size = 0x4, scoped, tag = 'scoped memory for tpu_custom_call.1']
    #allocation4 [shape = 's32[1]{0}', space=sflag, size = 0x4, scoped, tag = 'scoped memory for tpu_custom_call.1']
    #allocation5 [shape = 'u8[4096]{0}', space=vmem, size = 0x1000, scoped, tag = 'output window, operand 0, single buffered']
    %8 = vsyncpa [#allocation3], 0
    %9 = vsyncpa [#allocation4], 0
    // Predicated region
    $region2: #{tpu_custom_call.1} parent=1 // pred_check
      _
    $region3: #{tpu_custom_call.1} parent=1 // pred_check_branch
      %11 = sbr.rel (0) target = $region5
    $region4: #{tpu_custom_call.1} parent=1 // pred_region
      _
    $region5: #{tpu_custom_call.1} parent=1 // pred_fallthru
      _
    // Predicated region
    $region6: #{tpu_custom_call.1} parent=1 // pred_check
      _
    $region7: #{tpu_custom_call.1} parent=1 // pred_check_branch
      %13 = sbr.rel (0) target = $region9
    $region8: #{tpu_custom_call.1} parent=1 // pred_region
      %15 = vsyncadd [#allocation3], 0
      %s17 = sshll.u32 %s1, 4
      %s18 = int_to_ptr.hbm [resolvable:$true] %s17
      %s19 = sshll.u32 [#allocation2], 4
      %s20 = int_to_ptr.vmem [resolvable:$true] %s19
      %22 = dma.hbm_to_vmem [thread:$0]  %s18, 128, %s20, [#allocation3]
    $region9: #{tpu_custom_call.1} parent=1 // pred_fallthru
      _
    // Predicated region
    $region10: #{tpu_custom_call.1} parent=1 // pred_check
      _
    $region11: #{tpu_custom_call.1} parent=1 // pred_check_branch
      %24 = sbr.rel (0) target = $region13
    $region12: #{tpu_custom_call.1} parent=1 // pred_region
      _
    $region13: #{tpu_custom_call.1} parent=1 // pred_fallthru
      _
    // Predicated region
    $region14: #{tpu_custom_call.1} parent=1 // pred_check
      _
    $region15: #{tpu_custom_call.1} parent=1 // pred_check_branch
      %26 = sbr.rel (0) target = $region17
    $region16: #{tpu_custom_call.1} parent=1 // pred_region
      %28 = dma.done [#allocation3], 128
    $region17: #{tpu_custom_call.1} parent=1 // pred_fallthru
      _
    %v29 = vld [vmem:[%s0] sm:$0xff]
    %v30 = vld [vmem:[#allocation2] sm:$0xff]
    %v31 = vsub.f32 %v29, %v30
    %v32 = vmul.f32 %v31, %v31
    %vm33 = vcmask 261120
    %v34 = vsel %vm33, %v32, 0.0
    %35 = vadd.xlane.f32.xlu0 %v34
    %v36 = vpop.xlane.xlu0 %35
    %v37 = vld [vmem:[%s2] sm:$0xff]
    %v38 = vsub.f32 1.0, %v36
    %v39 = vmax.f32 %v38, 0.0
    %v40 = vmul.f32 %v37, %v36
    %v41 = vsub.f32 1.0, %v37
    %v42 = vmul.f32 %v41, %v39
    %v43 = vmul.f32 %v42, 5.0
    %v44 = vadd.f32 %v40, %v43
    %v45 = vmax.f32 %v44, 0.0
    %s46 = smul.u32 0, 8
    %v47 = vlaneseq
    %v48 = vshrl.u32 %v47, 7
    %v49 = vstv %s46
    %v50 = vadd.s32 %v49, %v48
    %vm51 = vcmp.lt.s32.totalorder %v50, 8
    %v52 = vsel %vm51, %v45, 0.0
    %vm53 = vcmask 7168
    %v54 = vsel %vm53, %v52, 0.0
    %55 = vadd.xlane.f32.xlu0 %v54
    %v56 = vpop.xlane.xlu0 %55
    %v57 = vrot.slane %v56, 4
    %v58 = vadd.f32 %v56, %v57
    %v59 = vrot.slane %v58, 2
    %v60 = vadd.f32 %v58, %v59
    %v61 = vrot.slane %v60, 1
    %v62 = vadd.f32 %v60, %v61
    %s63 = vtos %v62
    %v64 = vstv %s63
    %65 = vst [vmem:[#allocation5] sm:$0xff] %v64
    // Predicated region
    $region18: #{tpu_custom_call.1} parent=1 // pred_check
      _
    $region19: #{tpu_custom_call.1} parent=1 // pred_check_branch
      %67 = sbr.rel (0) target = $region21
    $region20: #{tpu_custom_call.1} parent=1 // pred_region
      %69 = vsyncadd [#allocation4], 0
      %s71 = sshll.u32 [#allocation5], 4
      %s72 = int_to_ptr.vmem [resolvable:$true] %s71
      %s73 = sshll.u32 %s3, 4
      %s74 = int_to_ptr.hbm [resolvable:$true] %s73
      %76 = dma.vmem_to_hbm [thread:$0]  %s72, 128, %s74, [#allocation4]
    $region21: #{tpu_custom_call.1} parent=1 // pred_fallthru
      _
    // Predicated region
    $region22: #{tpu_custom_call.1} parent=1 // pred_check
      _
    $region23: #{tpu_custom_call.1} parent=1 // pred_check_branch
      %78 = sbr.rel (0) target = $region25
    $region24: #{tpu_custom_call.1} parent=1 // pred_region
      %80 = dma.done [#allocation4], 128
    $region25: #{tpu_custom_call.1} parent=1 // pred_fallthru
      _
    %81 = vsyncpa [#allocation3], 1
    %82 = vsyncpa [#allocation4], 1

</llo_original>
